<compile_context>
chip_gen: v7x
topology: tpu7x:2x2x1
jax: 0.10.0
libtpu: 0.0.40
codegen_flags: <defaults>
</compile_context>

<pallas_src>
import jax
import jax.numpy as jnp
from jax.experimental import pallas as pl
from jax.experimental.pallas import tpu as pltpu

# Small, module-consistent synthetic shapes (real model: 2315 words / 4096 hidden).
N_WORDS = 16      # stands in for 2315
WORD_LEN = 5
HIDDEN = 32       # stands in for 4096
BATCH = 2
IN_FEATS = N_WORDS * WORD_LEN  # 80

LANE = 128
SUBLANE = 8
NEG_INF = -1e30   # fill for padded logit lanes -> softmax weight is exactly 0


def _round_up(v, m):
    return (v + m - 1) // m * m


def _tile(dim, pref, step):
    """Largest multiple of `step` <= pref that divides `dim` (dim % step == 0)."""
    t = max(step, (min(dim, pref) // step) * step)
    while dim % t:
        t -= step
    return t


# ----------------------------- kernels ------------------------------------ #

def _input_layer_kernel(x_ref, w1_ref, b1_ref, h_ref, acc_ref):
    """h = relu(x @ W1 + b1), accumulated over the K grid axis."""
    k = pl.program_id(2)

    @pl.when(k == 0)
    def _():
        acc_ref[...] = jnp.zeros_like(acc_ref)

    acc_ref[...] += jnp.dot(x_ref[...], w1_ref[...],
                            preferred_element_type=jnp.float32)

    @pl.when(k == pl.num_programs(2) - 1)
    def _():
        h = acc_ref[...] + b1_ref[...]                 # bias + relu in f32 (VPU)
        h_ref[...] = jnp.maximum(h, 0.0).astype(h_ref.dtype)


def _output_softmax_kernel(h_ref, wc_ref, bc_ref, out_ref, acc_ref):
    """probs = softmax(h @ Wc + bc) over the lane-dense (padded) word axis."""
    k = pl.program_id(1)

    @pl.when(k == 0)
    def _():
        acc_ref[...] = jnp.zeros_like(acc_ref)

    acc_ref[...] += jnp.dot(h_ref[...], wc_ref[...],
                            preferred_element_type=jnp.float32)

    @pl.when(k == pl.num_programs(1) - 1)
    def _():
        logits = acc_ref[...] + bc_ref[...]            # padded lanes hold -1e30
        m = jnp.max(logits, axis=-1, keepdims=True)
        e = jnp.exp(logits - m)
        denom = jnp.sum(e, axis=-1, keepdims=True)
        out_ref[...] = (e * pl.reciprocal(denom, approx=True)).astype(out_ref.dtype)


# ----------------------------- wrappers ------------------------------------ #

def fold_params(params):
    """Collapse the activation-free W2..W5 chain and pad all parameters to
    (8,128)-friendly shapes.  Runs once, offline (not in the forward hot path)."""
    (w1, b1), (w2, b2), (w3, b3), (w4, b4), (w5, b5) = params

    wc = w2 @ w3 @ w4 @ w5                              # (HIDDEN, N_WORDS)
    bc = ((b2 @ w3 + b3) @ w4 + b4) @ w5 + b5           # (1, N_WORDS)

    in_pad = _round_up(IN_FEATS, LANE)
    h_pad = _round_up(HIDDEN, LANE)
    n_pad = _round_up(N_WORDS, LANE)

    w1p = jnp.zeros((in_pad, h_pad), jnp.float32).at[:IN_FEATS, :HIDDEN].set(w1)
    b1p = jnp.zeros((1, h_pad), jnp.float32).at[:, :HIDDEN].set(b1)
    wcp = jnp.zeros((h_pad, n_pad), jnp.float32).at[:HIDDEN, :N_WORDS].set(wc)
    bcp = jnp.full((1, n_pad), NEG_INF, jnp.float32).at[:, :N_WORDS].set(bc)

    # bf16 weights halve HBM traffic (the dominant cost at real shapes);
    # biases and all accumulation stay f32.
    return w1p.astype(jnp.bfloat16), b1p, wcp.astype(jnp.bfloat16), bcp


def wordlenet_forward(x, folded_params):
    """x: (B, N_WORDS, WORD_LEN) float32. Returns (B, N_WORDS) softmax probs."""
    w1p, b1p, wcp, bcp = folded_params
    in_pad, h_pad = w1p.shape
    n_pad = wcp.shape[1]

    b = x.shape[0]
    b_pad = _round_up(max(b, SUBLANE), SUBLANE)         # >= 8 sublanes per MXU pass

    x_flat = x.reshape(b, -1)                           # nn.Flatten
    x_pad = jnp.zeros((b_pad, in_pad), jnp.float32)
    x_pad = x_pad.at[:b, :x_flat.shape[1]].set(x_flat).astype(jnp.bfloat16)

    # Tile plan: every (input, output, scratch) tile is <= ~16 MiB at real shapes,
    # so double-buffered working sets stay well under v7x's 64 MiB VMEM.
    tm = _tile(b_pad, 256, SUBLANE)
    tn1 = _tile(h_pad, 512, LANE)
    tk1 = _tile(in_pad, 512, LANE)
    tk2 = _tile(h_pad, 512, LANE)

    # ---------------- kernel 1: h = relu(x @ W1 + b1) ---------------- #
    grid1 = (b_pad // tm, h_pad // tn1, in_pad // tk1)
    bytes1 = x_pad.size * 2 + w1p.size * 2 + b1p.size * 4 + b_pad * h_pad * 2
    h1 = pl.pallas_call(
        _input_layer_kernel,
        out_shape=jax.ShapeDtypeStruct((b_pad, h_pad), jnp.bfloat16),
        grid_spec=pltpu.PrefetchScalarGridSpec(
            num_scalar_prefetch=0,
            grid=grid1,
            in_specs=[
                pl.BlockSpec((tm, tk1), lambda i, j, k: (i, k)),
                pl.BlockSpec((tk1, tn1), lambda i, j, k: (k, j)),
                pl.BlockSpec((1, tn1), lambda i, j, k: (0, j)),
            ],
            out_specs=pl.BlockSpec((tm, tn1), lambda i, j, k: (i, j)),
            scratch_shapes=[pltpu.VMEM((tm, tn1), jnp.float32)],
        ),
        compiler_params=pltpu.CompilerParams(
            dimension_semantics=("parallel", "parallel", "arbitrary"),
            vmem_limit_bytes=64 * 1024 * 1024),
        cost_estimate=pl.CostEstimate(
            flops=2 * b_pad * in_pad * h_pad,
            transcendentals=0,
            bytes_accessed=bytes1),
    )(x_pad, w1p, b1p)

    # ------------- kernel 2: probs = softmax(h @ Wc + bc) ------------- #
    grid2 = (b_pad // tm, h_pad // tk2)
    bytes2 = h1.size * 2 + wcp.size * 2 + bcp.size * 4 + b_pad * n_pad * 4
    out = pl.pallas_call(
        _output_softmax_kernel,
        out_shape=jax.ShapeDtypeStruct((b_pad, n_pad), jnp.float32),
        grid_spec=pltpu.PrefetchScalarGridSpec(
            num_scalar_prefetch=0,
            grid=grid2,
            in_specs=[
                pl.BlockSpec((tm, tk2), lambda i, k: (i, k)),
                pl.BlockSpec((tk2, n_pad), lambda i, k: (k, 0)),
                pl.BlockSpec((1, n_pad), lambda i, k: (0, 0)),
            ],
            out_specs=pl.BlockSpec((tm, n_pad), lambda i, k: (i, 0)),
            scratch_shapes=[pltpu.VMEM((tm, n_pad), jnp.float32)],
        ),
        compiler_params=pltpu.CompilerParams(
            dimension_semantics=("parallel", "arbitrary"),
            vmem_limit_bytes=64 * 1024 * 1024),
        cost_estimate=pl.CostEstimate(
            flops=2 * b_pad * h_pad * n_pad,
            transcendentals=b_pad * n_pad,
            bytes_accessed=bytes2),
    )(h1, wcp, bcp)

    # Drop batch/word padding.
    return out[:b, :N_WORDS]


# ----------------------------- reference / init ---------------------------- #

def init_params(key):
    """Deterministic parameter init; weights stored as (in, out), bias as (1, out)."""
    dims = [(IN_FEATS, HIDDEN), (HIDDEN, HIDDEN), (HIDDEN, HIDDEN),
            (HIDDEN, HIDDEN), (HIDDEN, N_WORDS)]
    params = []
    for (fan_in, fan_out) in dims:
        key, kw, kb = jax.random.split(key, 3)
        bound = 1.0 / jnp.sqrt(fan_in)
        w = jax.random.uniform(kw, (fan_in, fan_out), jnp.float32, -bound, bound)
        bv = jax.random.uniform(kb, (1, fan_out), jnp.float32, -bound, bound)
        params.append((w, bv))
    return params


def wordlenet_reference(x, params):
    """Pure-JAX f32 reference of the original (un-collapsed) 5-layer chain."""
    xf = x.reshape(x.shape[0], -1)
    (w1, b1), (w2, b2), (w3, b3), (w4, b4), (w5, b5) = params
    h = jnp.maximum(xf @ w1 + b1, 0.0)
    h = h @ w2 + b2
    h = h @ w3 + b3
    h = h @ w4 + b4
    logits = h @ w5 + b5
    return jax.nn.softmax(logits, axis=-1)


if __name__ == "__main__":
    key = jax.random.PRNGKey(0)
    kx, kp = jax.random.split(key)

    x = jax.random.normal(kx, (BATCH, N_WORDS, WORD_LEN), dtype=jnp.float32)
    params = init_params(kp)
    folded = fold_params(params)            # one-time offline preprocessing

    out = jax.block_until_ready(wordlenet_forward(x, folded))

    assert out.shape == (BATCH, N_WORDS)
    # Rows sum to ~1 (loose tolerance: bf16 weights + approximate EUP reciprocal).
    assert jnp.allclose(jnp.sum(out, axis=-1), 1.0, atol=1e-2)
    # Matches the un-collapsed f32 reference chain within bf16 tolerance.
    ref = wordlenet_reference(x, params)
    assert jnp.allclose(out, ref, atol=2e-2)

    print("KERNEL_OK")
</pallas_src>

<mosaic_0001>
module attributes {stable_mosaic.version = 11 : i64} {
  func.func @_input_layer_kernel(%arg0: i32, %arg1: i32, %arg2: i32, %arg3: memref<8x128xbf16, #tpu.memory_space<vmem>>, %arg4: memref<128x128xbf16, #tpu.memory_space<vmem>>, %arg5: memref<1x128xf32, #tpu.memory_space<vmem>>, %arg6: memref<8x128xbf16, #tpu.memory_space<vmem>>, %arg7: memref<8x128xf32, #tpu.memory_space<vmem>>) attributes {dimension_semantics = [#tpu.dimension_semantics<parallel>, #tpu.dimension_semantics<parallel>, #tpu.dimension_semantics<arbitrary>], iteration_bounds = array<i64: 1, 1, 1>, scalar_prefetch = 0 : i64, scratch_operands = 1 : i64, tpu.core_type = #tpu.core_type<tc>, window_params = [{transform_indices = @transform_0, window_bounds = array<i64: 8, 128>}, {transform_indices = @transform_1, window_bounds = array<i64: 128, 128>}, {transform_indices = @transform_2, window_bounds = array<i64: 1, 128>}, {transform_indices = @transform_3, window_bounds = array<i64: 8, 128>}]} {
    %c0_i32 = arith.constant 0 : i32
    %0 = arith.cmpi eq, %arg2, %c0_i32 : i32
    %1 = arith.extui %0 : i1 to i32
    %c0_i32_0 = arith.constant 0 : i32
    %2 = arith.cmpi ne, %1, %c0_i32_0 : i32
    scf.if %2 {
      %cst_10 = arith.constant 0.000000e+00 : f32
      %12 = vector.broadcast %cst_10 : f32 to vector<8x128xf32>
      %c0_11 = arith.constant 0 : index
      %c0_12 = arith.constant 0 : index
      %13 = vector.load %arg7[%c0_11, %c0_12] : memref<8x128xf32, #tpu.memory_space<vmem>>, vector<8x128xf32>
      tpu.vector_store %arg7[%c0_11, %c0_12], %12 {strides = array<i32>} : memref<8x128xf32, #tpu.memory_space<vmem>>, vector<8x128xf32>,
    } else {
    }
    %c0 = arith.constant 0 : index
    %c0_1 = arith.constant 0 : index
    %3 = vector.load %arg7[%c0, %c0_1] : memref<8x128xf32, #tpu.memory_space<vmem>>, vector<8x128xf32>
    %c0_2 = arith.constant 0 : index
    %c0_3 = arith.constant 0 : index
    %4 = vector.load %arg3[%c0_2, %c0_3] : memref<8x128xbf16, #tpu.memory_space<vmem>>, vector<8x128xbf16>
    %c0_4 = arith.constant 0 : index
    %c0_5 = arith.constant 0 : index
    %5 = vector.load %arg4[%c0_4, %c0_5] : memref<128x128xbf16, #tpu.memory_space<vmem>>, vector<128x128xbf16>
    %cst = arith.constant dense<0.000000e+00> : vector<8x128xf32>
    %6 = tpu.matmul %4, %5, %cst {dimension_numbers = #tpu.dot_dimension_numbers<[1], [0], [0], [1], [0, 0, 1, 1], [], []>} : vector<8x128xbf16>, vector<128x128xbf16>, vector<8x128xf32> -> vector<8x128xf32>
    %7 = arith.addf %3, %6 : vector<8x128xf32>
    %c0_6 = arith.constant 0 : index
    %c0_7 = arith.constant 0 : index
    %8 = vector.load %arg7[%c0_6, %c0_7] : memref<8x128xf32, #tpu.memory_space<vmem>>, vector<8x128xf32>
    tpu.vector_store %arg7[%c0_6, %c0_7], %7 {strides = array<i32>} : memref<8x128xf32, #tpu.memory_space<vmem>>, vector<8x128xf32>,
    %c0_i32_8 = arith.constant 0 : i32
    %9 = arith.cmpi eq, %arg2, %c0_i32_8 : i32
    %10 = arith.extui %9 : i1 to i32
    %c0_i32_9 = arith.constant 0 : i32
    %11 = arith.cmpi ne, %10, %c0_i32_9 : i32
    scf.if %11 {
      %c0_10 = arith.constant 0 : index
      %c0_11 = arith.constant 0 : index
      %12 = vector.load %arg7[%c0_10, %c0_11] : memref<8x128xf32, #tpu.memory_space<vmem>>, vector<8x128xf32>
      %c0_12 = arith.constant 0 : index
      %c0_13 = arith.constant 0 : index
      %13 = vector.load %arg5[%c0_12, %c0_13] : memref<1x128xf32, #tpu.memory_space<vmem>>, vector<1x128xf32>
      %14 = vector.broadcast %13 : vector<1x128xf32> to vector<8x128xf32>
      %15 = arith.addf %12, %14 : vector<8x128xf32>
      %cst_14 = arith.constant 0.000000e+00 : f32
      %16 = vector.broadcast %cst_14 : f32 to vector<8x128xf32>
      %17 = arith.maximumf %15, %16 : vector<8x128xf32>
      %18 = arith.truncf %17 : vector<8x128xf32> to vector<8x128xbf16>
      %c0_15 = arith.constant 0 : index
      %c0_16 = arith.constant 0 : index
      %19 = vector.load %arg6[%c0_15, %c0_16] : memref<8x128xbf16, #tpu.memory_space<vmem>>, vector<8x128xbf16>
      tpu.vector_store %arg6[%c0_15, %c0_16], %18 {strides = array<i32>} : memref<8x128xbf16, #tpu.memory_space<vmem>>, vector<8x128xbf16>,
    } else {
    }
    return
  }
  func.func @transform_0(%arg0: i32, %arg1: i32, %arg2: i32) -> (i32, i32) {
    %c0_i32 = arith.constant 0 : i32
    return %arg0, %arg2 : i32, i32
  }
  func.func @transform_1(%arg0: i32, %arg1: i32, %arg2: i32) -> (i32, i32) {
    %c0_i32 = arith.constant 0 : i32
    return %arg2, %arg1 : i32, i32
  }
  func.func @transform_2(%arg0: i32, %arg1: i32, %arg2: i32) -> (i32, i32) {
    %c0_i32 = arith.constant 0 : i32
    %c0_i32_0 = arith.constant 0 : i32
    return %c0_i32, %arg1 : i32, i32
  }
  func.func @transform_3(%arg0: i32, %arg1: i32, %arg2: i32) -> (i32, i32) {
    %c0_i32 = arith.constant 0 : i32
    return %arg0, %arg1 : i32, i32
  }
}

</mosaic_0001>

<llo_original>
// kernel: tpu_custom_call.1
$region0: #{tpu_custom_call.1}
  #allocation0 [shape = 'u32[]', space=smem, size = 0x4, offset = 0x4, fixed_abs, tag = 'smem constant byte address 0x4 - core index']
  #allocation1 [shape = 'u32[144,128]{1,0:T(1,128)}', space=vmem, size = 0x12000, scoped, tag = 'internal scratch']
  #allocation2 [shape = 'f32[8,128]{1,0:T(8,128)}', space=vmem, size = 0x1000, scoped, tag = 'scratch operand']
  %s0 = inlined_call_operand.hbm [shape: bf16[8,128], index: 0, kind: input, shape index: {}]
  %s1 = inlined_call_operand.hbm [shape: bf16[128,128], index: 1, kind: input, shape index: {}]
  %s2 = inlined_call_operand.hbm [shape: f32[1,128], index: 2, kind: input, shape index: {}]
  %s3 = inlined_call_operand.hbm [shape: bf16[8,128], index: 3, kind: output, shape index: {}]
  %s4 = sld [smem:[#allocation0]]
  $region42: #{tpu_custom_call.1} parent=0
    _
  %s6 = ssub.s32 1, %s4
  %s7 = scalar_select 0, %s6, %s4
  $region1: #{tpu_custom_call.1} parent=0
    #allocation3 [shape = 'u8[2048]{0}', space=vmem, size = 0x800, scoped, tag = 'input window, operand 0, single buffered']
    #allocation4 [shape = 's32[1]{0}', space=sflag, size = 0x4, scoped, tag = 'scoped memory for tpu_custom_call.1']
    #allocation5 [shape = 's32[1]{0}', space=sflag, size = 0x4, scoped, tag = 'scoped memory for tpu_custom_call.1']
    #allocation6 [shape = 'u8[32768]{0}', space=vmem, size = 0x8000, scoped, tag = 'input window, operand 1, single buffered']
    #allocation7 [shape = 's32[1]{0}', space=sflag, size = 0x4, scoped, tag = 'scoped memory for tpu_custom_call.1']
    #allocation8 [shape = 'u8[512]{0}', space=vmem, size = 0x400, scoped, tag = 'input window, operand 2, single buffered']
    #allocation9 [shape = 'u8[2048]{0}', space=vmem, size = 0x800, scoped, tag = 'output window, operand 0, single buffered']
    %8 = vsyncpa [#allocation4], 0
    %9 = vsyncpa [#allocation7], 0
    %10 = vsyncpa [#allocation5], 0
    // Predicated region
    $region2: #{tpu_custom_call.1} parent=1 // pred_check
      _
    $region3: #{tpu_custom_call.1} parent=1 // pred_check_branch
      %12 = sbr.rel (0) target = $region5
    $region4: #{tpu_custom_call.1} parent=1 // pred_region
      %s14 = ssub.s32 64, 64
      %15 = vsyncadd [#allocation4], %s14
      %s17 = sshll.u32 [#allocation3], 4
      %s18 = int_to_ptr.vmem [resolvable:$true] %s17
      %20 = dma.hbm_to_vmem [thread:$0]  %s0, 64, %s18, [#allocation4]
    $region5: #{tpu_custom_call.1} parent=1 // pred_fallthru
      _
    // Predicated region
    $region6: #{tpu_custom_call.1} parent=1 // pred_check
      _
    $region7: #{tpu_custom_call.1} parent=1 // pred_check_branch
      %22 = sbr.rel (0) target = $region9
    $region8: #{tpu_custom_call.1} parent=1 // pred_region
      %s24 = ssub.s32 1024, 1024
      %25 = vsyncadd [#allocation7], %s24
      %s26 = sshll.u32 [#allocation6], 4
      %s27 = int_to_ptr.vmem [resolvable:$true] %s26
      %32 = dma.hbm_to_vmem [thread:$0]  %s1, 1024, %s27, [#allocation7], 64, 64, 4
    $region9: #{tpu_custom_call.1} parent=1 // pred_fallthru
      _
    // Predicated region
    $region10: #{tpu_custom_call.1} parent=1 // pred_check
      _
    $region11: #{tpu_custom_call.1} parent=1 // pred_check_branch
      %34 = sbr.rel (0) target = $region13
    $region12: #{tpu_custom_call.1} parent=1 // pred_region
      %s36 = ssub.s32 16, 16
      %37 = vsyncadd [#allocation7], %s36
      %s39 = sshll.u32 [#allocation8], 4
      %s40 = int_to_ptr.vmem [resolvable:$true] %s39
      %42 = dma.hbm_to_vmem [thread:$0]  %s2, 16, %s40, [#allocation7]
    $region13: #{tpu_custom_call.1} parent=1 // pred_fallthru
      _
    // Predicated region
    $region14: #{tpu_custom_call.1} parent=1 // pred_check
      _
    $region15: #{tpu_custom_call.1} parent=1 // pred_check_branch
      %44 = sbr.rel (0) target = $region17
    $region16: #{tpu_custom_call.1} parent=1 // pred_region
      %45 = dma.done [#allocation4], 64
    $region17: #{tpu_custom_call.1} parent=1 // pred_fallthru
      _
    // Predicated region
    $region18: #{tpu_custom_call.1} parent=1 // pred_check
      _
    $region19: #{tpu_custom_call.1} parent=1 // pred_check_branch
      %47 = sbr.rel (0) target = $region21
    $region20: #{tpu_custom_call.1} parent=1 // pred_region
      %48 = dma.done [#allocation7], 1024
    $region21: #{tpu_custom_call.1} parent=1 // pred_fallthru
      _
    // Predicated region
    $region22: #{tpu_custom_call.1} parent=1 // pred_check
      _
    $region23: #{tpu_custom_call.1} parent=1 // pred_check_branch
      %50 = sbr.rel (0) target = $region25
    $region24: #{tpu_custom_call.1} parent=1 // pred_region
      %51 = dma.done [#allocation7], 16
    $region25: #{tpu_custom_call.1} parent=1 // pred_fallthru
      _
    %p53 = scmp.eq.s32.totalorder 0, 0
    // Predicated region
    $region26: #{tpu_custom_call.1} parent=1 // pred_check
      %p54 = pneg %p53
    $region27: #{tpu_custom_call.1} parent=1 // pred_check_branch
      %56 = sbr.rel (%p54) target = $region29
    $region28: #{tpu_custom_call.1} parent=1 // pred_region
      %57 = vst [vmem:[#allocation2] sm:$0xff] 0.0
    $region29: #{tpu_custom_call.1} parent=1 // pred_fallthru
      _
    %v58 = vld [vmem:[#allocation2] sm:$0xff]
    %v59 = vld [vmem:[#allocation3] sm:$0xf]
    %v60 = vld [vmem:[#allocation6] sm:$0xf]
    %v61 = vld [vmem:[#allocation6 + $0x4] sm:$0xf]
    %v62 = vld [vmem:[#allocation6 + $0x8] sm:$0xf]
    %v63 = vld [vmem:[#allocation6 + $0xc] sm:$0xf]
    %v64 = vld [vmem:[#allocation6 + $0x10] sm:$0xf]
    %v65 = vld [vmem:[#allocation6 + $0x14] sm:$0xf]
    %v66 = vld [vmem:[#allocation6 + $0x18] sm:$0xf]
    %v67 = vld [vmem:[#allocation6 + $0x1c] sm:$0xf]
    %v68 = vld [vmem:[#allocation6 + $0x20] sm:$0xf]
    %v69 = vld [vmem:[#allocation6 + $0x24] sm:$0xf]
    %v70 = vld [vmem:[#allocation6 + $0x28] sm:$0xf]
    %v71 = vld [vmem:[#allocation6 + $0x2c] sm:$0xf]
    %v72 = vld [vmem:[#allocation6 + $0x30] sm:$0xf]
    %v73 = vld [vmem:[#allocation6 + $0x34] sm:$0xf]
    %v74 = vld [vmem:[#allocation6 + $0x38] sm:$0xf]
    %v75 = vld [vmem:[#allocation6 + $0x3c] sm:$0xf]
    %v92 = vunpack.c.l.b16 %v60
    %v93 = vunpack.c.l.b16 %v61
    %v94 = vunpack.c.l.b16 %v62
    %v95 = vunpack.c.l.b16 %v63
    %v96 = vunpack.c.l.b16 %v64
    %v97 = vunpack.c.l.b16 %v65
    %v98 = vunpack.c.l.b16 %v66
    %v99 = vunpack.c.l.b16 %v67
    %v100 = vunpack.c.l.b16 %v68
    %v101 = vunpack.c.l.b16 %v69
    %v102 = vunpack.c.l.b16 %v70
    %v103 = vunpack.c.l.b16 %v71
    %v104 = vunpack.c.l.b16 %v72
    %v105 = vunpack.c.l.b16 %v73
    %v106 = vunpack.c.l.b16 %v74
    %v107 = vunpack.c.l.b16 %v75
    %v108 = vpack.c.b16 %v93, %v92
    %v109 = vpack.c.b16 %v95, %v94
    %v110 = vpack.c.b16 %v97, %v96
    %v111 = vpack.c.b16 %v99, %v98
    %v112 = vpack.c.b16 %v101, %v100
    %v113 = vpack.c.b16 %v103, %v102
    %v114 = vpack.c.b16 %v105, %v104
    %v115 = vpack.c.b16 %v107, %v106
    %124 = vmatprep.subr.bf16.mxu0 0
    %125 = vmatpush1.bf16.msra.mxu0 %v108
    %126 = vmatprep.subr.bf16.mxu0 0
    %127 = vmatpush1.bf16.msra.mxu0 %v109
    %128 = vmatprep.subr.bf16.mxu0 0
    %129 = vmatpush1.bf16.msra.mxu0 %v110
    %130 = vmatprep.subr.bf16.mxu0 0
    %131 = vmatpush1.bf16.msra.mxu0 %v111
    %132 = vmatprep.subr.bf16.mxu0 0
    %133 = vmatpush1.bf16.msra.mxu0 %v112
    %134 = vmatprep.subr.bf16.mxu0 0
    %135 = vmatpush1.bf16.msra.mxu0 %v113
    %136 = vmatprep.subr.bf16.mxu0 0
    %137 = vmatpush1.bf16.msra.mxu0 %v114
    %138 = vmatprep.subr.bf16.mxu0 0
    %139 = vmatpush1.bf16.msra.mxu0 %v115
    %140 = vmatprep.subr.bf16.mxu0 0
    %141 = vmatpush1.bf16.msra.mxu0 0
    %142 = vmatprep.subr.bf16.mxu0 0
    %143 = vmatpush1.bf16.msra.mxu0 0
    %144 = vmatprep.subr.bf16.mxu0 0
    %145 = vmatpush1.bf16.msra.mxu0 0
    %146 = vmatprep.subr.bf16.mxu0 0
    %147 = vmatpush1.bf16.msra.mxu0 0
    %148 = vmatprep.subr.bf16.mxu0 0
    %149 = vmatpush1.bf16.msra.mxu0 0
    %150 = vmatprep.subr.bf16.mxu0 0
    %151 = vmatpush1.bf16.msra.mxu0 0
    %152 = vmatprep.subr.bf16.mxu0 0
    %153 = vmatpush1.bf16.msra.mxu0 0
    %154 = vmatprep.subr.bf16.mxu0 0
    %155 = vmatpush1.bf16.msra.mxu0 0
    %156 = vmatprep.mubr.bf16.mxu0 0
    %157 = vmatmul.mubr.bf16.gmra.mrb[0].mxu0 %v59
    %v158 = vpop.f32.mrb[0].mxu0
    %v159 = vadd.f32 0.0, %v158
    %v160 = vpop.f32.mrb[0].mxu0
    %v161 = vpop.f32.mrb[0].mxu0
    %v162 = vpop.f32.mrb[0].mxu0
    %163 = vdwg.mxu0
    %v164 = vadd.f32 %v58, %v159
    %165 = vst [vmem:[#allocation2] sm:$0xff] %v164
    // Predicated region
    $region30: #{tpu_custom_call.1} parent=1 // pred_check
      %p166 = pneg %p53
    $region31: #{tpu_custom_call.1} parent=1 // pred_check_branch
      %168 = sbr.rel (%p166) target = $region33
    $region32: #{tpu_custom_call.1} parent=1 // pred_region
      %v169 = vld [vmem:[#allocation2] sm:$0xff]
      %v170 = vld [vmem:[#allocation8] sm:$0x1]
      %v172 = vlaneseq
      %v173 = vshrl.u32 %v172, 7
      %v174 = vsub.s32 0, %v173
      %v175 = vrot.slane %v170, %v174
      %v177 = vadd.f32 %v169, %v175
      %v178 = vmax.f32 %v177, 0.0
      %v179 = vpack.c.bf16 %v178, %v178
      %180 = vst [vmem:[#allocation9] sm:$0xf] %v179
    $region33: #{tpu_custom_call.1} parent=1 // pred_fallthru
      _
    // Predicated region
    $region34: #{tpu_custom_call.1} parent=1 // pred_check
      _
    $region35: #{tpu_custom_call.1} parent=1 // pred_check_branch
      %182 = sbr.rel (0) target = $region37
    $region36: #{tpu_custom_call.1} parent=1 // pred_region
      %s184 = ssub.s32 64, 64
      %185 = vsyncadd [#allocation5], %s184
      %s187 = sshll.u32 [#allocation9], 4
      %s188 = int_to_ptr.vmem [resolvable:$true] %s187
      %190 = dma.vmem_to_hbm [thread:$0]  %s188, 64, %s3, [#allocation5]
    $region37: #{tpu_custom_call.1} parent=1 // pred_fallthru
      _
    // Predicated region
    $region38: #{tpu_custom_call.1} parent=1 // pred_check
      _
    $region39: #{tpu_custom_call.1} parent=1 // pred_check_branch
      %192 = sbr.rel (0) target = $region41
    $region40: #{tpu_custom_call.1} parent=1 // pred_region
      %193 = dma.done [#allocation5], 64
    $region41: #{tpu_custom_call.1} parent=1 // pred_fallthru
      _
    %194 = vsyncpa [#allocation4], 1
    %195 = vsyncpa [#allocation7], 1
    %196 = vsyncpa [#allocation5], 1

</llo_original>
